<compile_context>
chip_gen: v6e
topology: v6e:2x2x1
jax: 0.10.0
libtpu: 0.0.40
codegen_flags: <defaults>
</compile_context>

<pallas_src>
import functools

import jax
import jax.numpy as jnp
from jax.experimental import pallas as pl
from jax.experimental.pallas import tpu as pltpu


# --------------------------------------------------------------------------- #
# Kernels
# --------------------------------------------------------------------------- #
def _swiglu_kernel_single(x_ref, w1_ref, w3_ref, w2_ref, o_ref):
    """nf == 1: whole d_ff in one step -> no accumulator scratch needed."""
    x = x_ref[...].astype(w1_ref.dtype)                                   # (tm, d_model)
    h1 = jnp.dot(x, w1_ref[...], preferred_element_type=jnp.float32)     # (tm, tf)
    h3 = jnp.dot(x, w3_ref[...], preferred_element_type=jnp.float32)     # (tm, tf)
    g = (h1 * jax.nn.sigmoid(h1) * h3).astype(w2_ref.dtype)              # SiLU(h1)*h3, f32 math
    o_ref[...] = jnp.dot(g, w2_ref[...],
                         preferred_element_type=jnp.float32).astype(o_ref.dtype)


def _swiglu_kernel_acc(x_ref, w1_ref, w3_ref, w2_ref, o_ref, acc_ref):
    """Grid: (row tile i [parallel], d_ff tile f [reduction, last])."""
    f = pl.program_id(1)
    nf = pl.num_programs(1)

    @pl.when(f == 0)
    def _():
        acc_ref[...] = jnp.zeros_like(acc_ref)

    x = x_ref[...].astype(w1_ref.dtype)                                   # (tm, d_model)
    h1 = jnp.dot(x, w1_ref[...], preferred_element_type=jnp.float32)     # (tm, tf)
    h3 = jnp.dot(x, w3_ref[...], preferred_element_type=jnp.float32)     # (tm, tf)
    g = (h1 * jax.nn.sigmoid(h1) * h3).astype(w2_ref.dtype)              # f32 math, round for MXU
    contrib = jnp.dot(g, w2_ref[...], preferred_element_type=jnp.float32)  # (tm, d_model)

    @pl.when(f < nf - 1)
    def _():
        acc_ref[...] += contrib

    @pl.when(f == nf - 1)
    def _():
        # Final step writes output directly (no extra acc read-modify-write).
        o_ref[...] = (acc_ref[...] + contrib).astype(o_ref.dtype)


# --------------------------------------------------------------------------- #
# Helpers
# --------------------------------------------------------------------------- #
def _round_up(v, m):
    return (v + m - 1) // m * m


def _chip_defaults():
    """Per-generation (row tile, d_ff tile, VMEM capacity bytes)."""
    kind = ""
    try:
        kind = jax.devices()[0].device_kind.lower()
    except Exception:
        pass
    try:
        vmem_cap = int(pltpu.get_tpu_info().vmem_capacity_bytes)
    except Exception:
        vmem_cap = 64 << 20  # conservative (v7x-class VMEM)
    if "v7" in kind:
        tm, tf = 512, 256        # ~310 FLOP/byte knee, 64 MiB VMEM per TC
    elif "v6" in kind:
        tm, tf = 1024, 1024      # ~600 FLOP/byte knee, 128 MiB VMEM
    elif "v5" in kind:
        tm, tf = 512, 512        # ~240 FLOP/byte knee, 128 MiB VMEM
    else:
        tm, tf = 512, 256        # unknown: assume small-VMEM class
    return tm, tf, vmem_cap


def prepare_swiglu_weights(w1, w3, w2, *, compute_dtype=jnp.bfloat16, ff_align=256):
    """One-time (init-time) weight preparation; hoisted out of the forward path.

    w1, w3: (d_model, d_ff); w2: (d_ff, d_model).  d_ff is zero-padded up to a
    multiple of `ff_align` (exact: SiLU(0)*0 = 0 and zero w2 rows contribute
    nothing) and the weights are cast once to `compute_dtype`.
    """
    assert ff_align % 128 == 0, "ff_align must be a multiple of 128"
    d_model, d_ff = w1.shape
    cdt = jnp.dtype(compute_dtype)
    d_ff_p = _round_up(d_ff, ff_align)
    pad = d_ff_p - d_ff
    w1p = jnp.pad(w1, ((0, 0), (0, pad))).astype(cdt)
    w3p = jnp.pad(w3, ((0, 0), (0, pad))).astype(cdt)
    w2p = jnp.pad(w2, ((0, pad), (0, 0))).astype(cdt)
    return w1p, w3p, w2p


# --------------------------------------------------------------------------- #
# Forward
# --------------------------------------------------------------------------- #
@functools.partial(jax.jit, static_argnames=("tm", "tf"))
def swiglu(x, w1p, w3p, w2p, *, tm=None, tf=None):
    """SwiGLU forward: y = (SiLU(x @ w1) * (x @ w3)) @ w2.

    x: (..., d_model).  w1p/w3p/w2p come from prepare_swiglu_weights (already
    cast to the compute dtype and d_ff-padded).  Accumulation is f32; output
    keeps x.dtype.
    """
    d_model, d_ff_p = w1p.shape
    cdt = jnp.dtype(w1p.dtype)
    out_dtype = x.dtype

    orig_shape = x.shape
    x2d = x.reshape(-1, d_model)
    n_rows = x2d.shape[0]

    tm_d, tf_d, vmem_cap = _chip_defaults()
    tm = tm_d if tm is None else tm
    tf = tf_d if tf is None else tf

    # ---- tile sizes --------------------------------------------------------
    sub = max(8, 32 // cdt.itemsize)          # packed sublane rows of compute dtype
    tm_eff = min(_round_up(tm, sub), _round_up(n_rows, sub))
    tm_eff = max(tm_eff, sub)

    def _ff_divisor(upper):
        """Largest multiple of 128 that divides d_ff_p and is <= upper."""
        upper = max(128, min(upper, d_ff_p) // 128 * 128)
        for cand in range(upper, 127, -128):
            if d_ff_p % cand == 0:
                return cand
        return 128

    tf_eff = _ff_divisor(tf)

    # ---- keep double-buffered tiles + f32 accumulator within VMEM ----------
    def _footprint(tm_e, tf_e):
        x_t = tm_e * d_model * jnp.dtype(x.dtype).itemsize
        w_t = 3 * d_model * tf_e * cdt.itemsize
        o_t = tm_e * d_model * jnp.dtype(out_dtype).itemsize
        acc_t = tm_e * d_model * 4
        return 2 * (x_t + w_t + o_t) + acc_t

    budget = int(0.85 * vmem_cap)
    # Prefer shrinking tf (only changes reduction-step count) before tm
    # (which sets the FLOP/byte arithmetic intensity of the weight stream).
    while _footprint(tm_eff, tf_eff) > budget and tf_eff > 128:
        smaller = _ff_divisor(tf_eff - 128)
        if smaller >= tf_eff:
            break
        tf_eff = smaller
    while _footprint(tm_eff, tf_eff) > budget and tm_eff > sub:
        tm_eff = max(sub, _round_up(tm_eff // 2, sub))

    nf = d_ff_p // tf_eff
    grid = (pl.cdiv(n_rows, tm_eff), nf)      # ragged last row block is fine: rows independent

    vmem_limit = max(32 << 20, int(1.2 * _footprint(tm_eff, tf_eff)) + (1 << 20))
    vmem_limit = min(vmem_limit, budget)      # never above physical VMEM (v7x: 64 MiB)

    in_specs = [
        pl.BlockSpec((tm_eff, d_model), lambda i, f: (i, 0)),     # x row tile
        pl.BlockSpec((d_model, tf_eff), lambda i, f: (0, f)),     # w1 column tile
        pl.BlockSpec((d_model, tf_eff), lambda i, f: (0, f)),     # w3 column tile
        pl.BlockSpec((tf_eff, d_model), lambda i, f: (f, 0)),     # w2 row tile
    ]
    out_spec = pl.BlockSpec((tm_eff, d_model), lambda i, f: (i, 0))

    if nf == 1:
        kernel, scratch = _swiglu_kernel_single, ()
    else:
        kernel = _swiglu_kernel_acc
        scratch = (pltpu.VMEM((tm_eff, d_model), jnp.float32),)

    out = pl.pallas_call(
        kernel,
        out_shape=jax.ShapeDtypeStruct((n_rows, d_model), out_dtype),
        grid_spec=pltpu.PrefetchScalarGridSpec(
            num_scalar_prefetch=0,
            grid=grid,
            in_specs=in_specs,
            out_specs=out_spec,
            scratch_shapes=scratch,
        ),
        compiler_params=pltpu.CompilerParams(
            dimension_semantics=("parallel", "arbitrary"),
            vmem_limit_bytes=vmem_limit,
        ),
    )(x2d, w1p, w3p, w2p)

    return out.reshape(orig_shape)


def swiglu_ref(x, w1, w3, w2):
    """Pure-JAX reference: W2(SiLU(W1 x) * W3 x)."""
    h1 = x @ w1
    h3 = x @ w3
    return (h1 * jax.nn.sigmoid(h1) * h3) @ w2


# --------------------------------------------------------------------------- #
# Self-test
# --------------------------------------------------------------------------- #
if __name__ == "__main__":
    # Small, module-consistent shapes: batch=2, seq=8, d_model=64, d_ff=256.
    batch, seq, d_model, d_ff = 2, 8, 64, 256

    key = jax.random.PRNGKey(0)
    kx, k1, k3, k2, kx2, k1o, k3o, k2o = jax.random.split(key, 8)

    x = jax.random.normal(kx, (batch, seq, d_model), dtype=jnp.float32)
    w1 = jax.random.normal(k1, (d_model, d_ff), dtype=jnp.float32) * (1.0 / d_model) ** 0.5
    w3 = jax.random.normal(k3, (d_model, d_ff), dtype=jnp.float32) * (1.0 / d_model) ** 0.5
    w2 = jax.random.normal(k2, (d_ff, d_model), dtype=jnp.float32) * (1.0 / d_ff) ** 0.5

    y_ref = swiglu_ref(x, w1, w3, w2)

    # 1) f32 compute path (single reduction step) — tight comparison.
    w1f, w3f, w2f = prepare_swiglu_weights(w1, w3, w2, compute_dtype=jnp.float32)
    y_f32 = jax.block_until_ready(swiglu(x, w1f, w3f, w2f))
    assert y_f32.shape == x.shape and y_f32.dtype == x.dtype
    assert jnp.allclose(y_f32, y_ref, atol=1e-4, rtol=1e-4), "f32 mismatch vs reference"

    # 2) multi-step reduction path (nf > 1) to exercise the accumulator logic.
    y_multi = jax.block_until_ready(swiglu(x, w1f, w3f, w2f, tm=16, tf=128))
    assert jnp.allclose(y_multi, y_ref, atol=1e-4, rtol=1e-4), "multi-step mismatch"

    # 3) default fast path: bf16 operands, f32 accumulation.
    w1b, w3b, w2b = prepare_swiglu_weights(w1, w3, w2)        # bf16 by default
    y_bf16 = jax.block_until_ready(swiglu(x, w1b, w3b, w2b))
    xb = x.astype(jnp.bfloat16).astype(jnp.float32)
    ref_bf16 = swiglu_ref(
        xb,
        w1b[:, :d_ff].astype(jnp.float32),
        w3b[:, :d_ff].astype(jnp.float32),
        w2b[:d_ff].astype(jnp.float32),
    )
    assert jnp.allclose(y_bf16, ref_bf16, atol=5e-2, rtol=5e-2), "bf16 mismatch"

    # 4) ragged shapes: d_ff=200 (zero-padded to 256 at init) and 24 rows with
    #    a 16-row tile (ragged last row block, no host-side padding of x).
    d_ff_odd = 200
    x_odd = jax.random.normal(kx2, (3, 8, d_model), dtype=jnp.float32)
    w1o = jax.random.normal(k1o, (d_model, d_ff_odd), dtype=jnp.float32) * (1.0 / d_model) ** 0.5
    w3o = jax.random.normal(k3o, (d_model, d_ff_odd), dtype=jnp.float32) * (1.0 / d_model) ** 0.5
    w2o = jax.random.normal(k2o, (d_ff_odd, d_model), dtype=jnp.float32) * (1.0 / d_ff_odd) ** 0.5
    w1of, w3of, w2of = prepare_swiglu_weights(w1o, w3o, w2o, compute_dtype=jnp.float32)
    y_odd = jax.block_until_ready(swiglu(x_odd, w1of, w3of, w2of, tm=16))
    y_odd_ref = swiglu_ref(x_odd, w1o, w3o, w2o)
    assert y_odd.shape == x_odd.shape
    assert jnp.allclose(y_odd, y_odd_ref, atol=1e-4, rtol=1e-4), "padded/ragged mismatch"

    print("KERNEL_OK")
</pallas_src>

<mosaic_0001>
module attributes {stable_mosaic.version = 11 : i64} {
  func.func @_swiglu_kernel_single(%arg0: i32, %arg1: i32, %arg2: memref<16x64xf32, #tpu.memory_space<vmem>>, %arg3: memref<64x256xf32, #tpu.memory_space<vmem>>, %arg4: memref<64x256xf32, #tpu.memory_space<vmem>>, %arg5: memref<256x64xf32, #tpu.memory_space<vmem>>, %arg6: memref<16x64xf32, #tpu.memory_space<vmem>>) attributes {dimension_semantics = [#tpu.dimension_semantics<parallel>, #tpu.dimension_semantics<arbitrary>], iteration_bounds = array<i64: 1, 1>, scalar_prefetch = 0 : i64, scratch_operands = 0 : i64, tpu.core_type = #tpu.core_type<tc>, window_params = [{transform_indices = @transform_0, window_bounds = array<i64: 16, 64>}, {transform_indices = @transform_1, window_bounds = array<i64: 64, 256>}, {transform_indices = @transform_2, window_bounds = array<i64: 64, 256>}, {transform_indices = @transform_3, window_bounds = array<i64: 256, 64>}, {transform_indices = @transform_4, window_bounds = array<i64: 16, 64>}]} {
    %c0 = arith.constant 0 : index
    %c0_0 = arith.constant 0 : index
    %0 = vector.load %arg2[%c0, %c0_0] : memref<16x64xf32, #tpu.memory_space<vmem>>, vector<16x64xf32>
    %c0_1 = arith.constant 0 : index
    %c0_2 = arith.constant 0 : index
    %1 = vector.load %arg3[%c0_1, %c0_2] : memref<64x256xf32, #tpu.memory_space<vmem>>, vector<64x256xf32>
    %cst = arith.constant dense<0.000000e+00> : vector<16x256xf32>
    %2 = tpu.matmul %0, %1, %cst {dimension_numbers = #tpu.dot_dimension_numbers<[1], [0], [0], [1], [0, 0, 1, 1], [], []>} : vector<16x64xf32>, vector<64x256xf32>, vector<16x256xf32> -> vector<16x256xf32>
    %c0_3 = arith.constant 0 : index
    %c0_4 = arith.constant 0 : index
    %3 = vector.load %arg4[%c0_3, %c0_4] : memref<64x256xf32, #tpu.memory_space<vmem>>, vector<64x256xf32>
    %cst_5 = arith.constant dense<0.000000e+00> : vector<16x256xf32>
    %4 = tpu.matmul %0, %3, %cst_5 {dimension_numbers = #tpu.dot_dimension_numbers<[1], [0], [0], [1], [0, 0, 1, 1], [], []>} : vector<16x64xf32>, vector<64x256xf32>, vector<16x256xf32> -> vector<16x256xf32>
    %5 = arith.negf %2 : vector<16x256xf32>
    %6 = math.exp %5 : vector<16x256xf32>
    %cst_6 = arith.constant 1.000000e+00 : f32
    %7 = vector.broadcast %cst_6 : f32 to vector<16x256xf32>
    %8 = arith.addf %7, %6 : vector<16x256xf32>
    %9 = arith.divf %7, %8 : vector<16x256xf32>
    %10 = arith.mulf %2, %9 : vector<16x256xf32>
    %11 = arith.mulf %10, %4 : vector<16x256xf32>
    %c0_7 = arith.constant 0 : index
    %c0_8 = arith.constant 0 : index
    %12 = vector.load %arg5[%c0_7, %c0_8] : memref<256x64xf32, #tpu.memory_space<vmem>>, vector<256x64xf32>
    %cst_9 = arith.constant dense<0.000000e+00> : vector<16x64xf32>
    %13 = tpu.matmul %11, %12, %cst_9 {dimension_numbers = #tpu.dot_dimension_numbers<[1], [0], [0], [1], [0, 0, 1, 1], [], []>} : vector<16x256xf32>, vector<256x64xf32>, vector<16x64xf32> -> vector<16x64xf32>
    %c0_10 = arith.constant 0 : index
    %c0_11 = arith.constant 0 : index
    %14 = vector.load %arg6[%c0_10, %c0_11] : memref<16x64xf32, #tpu.memory_space<vmem>>, vector<16x64xf32>
    tpu.vector_store %arg6[%c0_10, %c0_11], %13 {strides = array<i32>} : memref<16x64xf32, #tpu.memory_space<vmem>>, vector<16x64xf32>,
    return
  }
  func.func @transform_0(%arg0: i32, %arg1: i32) -> (i32, i32) {
    %c0_i32 = arith.constant 0 : i32
    %c0_i32_0 = arith.constant 0 : i32
    return %arg0, %c0_i32 : i32, i32
  }
  func.func @transform_1(%arg0: i32, %arg1: i32) -> (i32, i32) {
    %c0_i32 = arith.constant 0 : i32
    %c0_i32_0 = arith.constant 0 : i32
    return %c0_i32, %arg1 : i32, i32
  }
  func.func @transform_2(%arg0: i32, %arg1: i32) -> (i32, i32) {
    %c0_i32 = arith.constant 0 : i32
    %c0_i32_0 = arith.constant 0 : i32
    return %c0_i32, %arg1 : i32, i32
  }
  func.func @transform_3(%arg0: i32, %arg1: i32) -> (i32, i32) {
    %c0_i32 = arith.constant 0 : i32
    %c0_i32_0 = arith.constant 0 : i32
    return %arg1, %c0_i32 : i32, i32
  }
  func.func @transform_4(%arg0: i32, %arg1: i32) -> (i32, i32) {
    %c0_i32 = arith.constant 0 : i32
    %c0_i32_0 = arith.constant 0 : i32
    return %arg0, %c0_i32 : i32, i32
  }
}

</mosaic_0001>

<llo_original>
// kernel: swiglu.1
$region0: #{swiglu.1}
  #allocation0 [shape = 'u32[]', space=smem, size = 0x4, offset = 0x4, fixed_abs, tag = 'smem constant byte address 0x4 - core index']
  #allocation1 [shape = 'u32[144,128]{1,0:T(1,128)}', space=vmem, size = 0x12000, scoped, tag = 'internal scratch']
  %s0 = inlined_call_operand.vmem [shape: f32[16,64], index: 0, kind: input, shape index: {}]
  %s1 = inlined_call_operand.vmem [shape: f32[64,256], index: 1, kind: input, shape index: {}]
  %s2 = inlined_call_operand.vmem [shape: f32[64,256], index: 2, kind: input, shape index: {}]
  %s3 = inlined_call_operand.vmem [shape: f32[256,64], index: 3, kind: input, shape index: {}]
  %s4 = inlined_call_operand.hbm [shape: f32[16,64], index: 4, kind: output, shape index: {}]
  %s5 = sld [smem:[#allocation0]]
  $region26: #{swiglu.1} parent=0
    _
  %s7 = ssub.s32 1, %s5
  %s8 = scalar_select 0, %s7, %s5
  $region1: #{swiglu.1} parent=0
    #allocation2 [shape = 'u8[8192]{0}', space=vmem, size = 0x2000, scoped, tag = 'output window, operand 0, single buffered']
    #allocation3 [shape = 's32[1]{0}', space=sflag, size = 0x4, scoped, tag = 'scoped memory for swiglu.1']
    %9 = vsyncpa [#allocation3], 0
    // Predicated region
    $region2: #{swiglu.1} parent=1 // pred_check
      _
    $region3: #{swiglu.1} parent=1 // pred_check_branch
      %11 = sbr.rel (0) target = $region5
    $region4: #{swiglu.1} parent=1 // pred_region
      _
    $region5: #{swiglu.1} parent=1 // pred_fallthru
      _
    // Predicated region
    $region6: #{swiglu.1} parent=1 // pred_check
      _
    $region7: #{swiglu.1} parent=1 // pred_check_branch
      %13 = sbr.rel (0) target = $region9
    $region8: #{swiglu.1} parent=1 // pred_region
      _
    $region9: #{swiglu.1} parent=1 // pred_fallthru
      _
    // Predicated region
    $region10: #{swiglu.1} parent=1 // pred_check
      _
    $region11: #{swiglu.1} parent=1 // pred_check_branch
      %15 = sbr.rel (0) target = $region13
    $region12: #{swiglu.1} parent=1 // pred_region
      _
    $region13: #{swiglu.1} parent=1 // pred_fallthru
      _
    // Predicated region
    $region14: #{swiglu.1} parent=1 // pred_check
      _
    $region15: #{swiglu.1} parent=1 // pred_check_branch
      %17 = sbr.rel (0) target = $region17
    $region16: #{swiglu.1} parent=1 // pred_region
      _
    $region17: #{swiglu.1} parent=1 // pred_fallthru
      _
    %v18 = vld [vmem:[%s0] sm:$0xff]
    %v19 = vld [vmem:[%s0 + $0x8] sm:$0xff]
    %v20 = vld [vmem:[%s1] sm:$0xff]
    %v21 = vld [vmem:[%s1 + $0x8] sm:$0xff]
    %v22 = vld [vmem:[%s1 + $0x10] sm:$0xff]
    %v23 = vld [vmem:[%s1 + $0x18] sm:$0xff]
    %v24 = vld [vmem:[%s1 + $0x20] sm:$0xff]
    %v25 = vld [vmem:[%s1 + $0x28] sm:$0xff]
    %v26 = vld [vmem:[%s1 + $0x30] sm:$0xff]
    %v27 = vld [vmem:[%s1 + $0x38] sm:$0xff]
    %v28 = vld [vmem:[%s1 + $0x40] sm:$0xff]
    %v29 = vld [vmem:[%s1 + $0x48] sm:$0xff]
    %v30 = vld [vmem:[%s1 + $0x50] sm:$0xff]
    %v31 = vld [vmem:[%s1 + $0x58] sm:$0xff]
    %v32 = vld [vmem:[%s1 + $0x60] sm:$0xff]
    %v33 = vld [vmem:[%s1 + $0x68] sm:$0xff]
    %v34 = vld [vmem:[%s1 + $0x70] sm:$0xff]
    %v35 = vld [vmem:[%s1 + $0x78] sm:$0xff]
    %vm36 = vcmask 523264
    %v38 = vsel %vm36, %v18, 0
    %v41 = vsel %vm36, %v19, 0
    %43 = vmatprep.subr.mxu0 0.0
    %44 = vmatpush1.msra.mxu0 0.0
    %45 = vmatprep.subr.mxu0 0.0
    %46 = vmatpush1.msra.mxu0 0.0
    %47 = vmatprep.subr.mxu0 0.0
    %48 = vmatpush1.msra.mxu0 0.0
    %49 = vmatprep.subr.mxu0 0.0
    %50 = vmatpush1.msra.mxu0 0.0
    %51 = vmatprep.subr.mxu0 0.0
    %52 = vmatpush1.msra.mxu0 0.0
    %53 = vmatprep.subr.mxu0 0.0
    %54 = vmatpush1.msra.mxu0 0.0
    %55 = vmatprep.subr.mxu0 0.0
    %56 = vmatpush1.msra.mxu0 0.0
    %57 = vmatprep.subr.mxu0 0.0
    %58 = vmatpush1.msra.mxu0 0.0
    %59 = vmatprep.subr.mxu0 %v35
    %60 = vmatpush1.msra.mxu0 %v34
    %61 = vmatprep.subr.mxu0 %v33
    %62 = vmatpush1.msra.mxu0 %v32
    %63 = vmatprep.subr.mxu0 %v31
    %64 = vmatpush1.msra.mxu0 %v30
    %65 = vmatprep.subr.mxu0 %v29
    %66 = vmatpush1.msra.mxu0 %v28
    %67 = vmatprep.subr.mxu0 %v27
    %68 = vmatpush1.msra.mxu0 %v26
    %69 = vmatprep.subr.mxu0 %v25
    %70 = vmatpush1.msra.mxu0 %v24
    %71 = vmatprep.subr.mxu0 %v23
    %72 = vmatpush1.msra.mxu0 %v22
    %73 = vmatprep.subr.mxu0 %v21
    %74 = vmatpush1.msra.mxu0 %v20
    %75 = vmatprep.subr.mxu0 0.0
    %76 = vmatpush2.msra.mxu0 0.0
    %77 = vmatprep.subr.mxu0 0.0
    %78 = vmatpush2.msra.mxu0 0.0
    %79 = vmatprep.subr.mxu0 0.0
    %80 = vmatpush2.msra.mxu0 0.0
    %81 = vmatprep.subr.mxu0 0.0
    %82 = vmatpush2.msra.mxu0 0.0
    %83 = vmatprep.subr.mxu0 0.0
    %84 = vmatpush2.msra.mxu0 0.0
    %85 = vmatprep.subr.mxu0 0.0
    %86 = vmatpush2.msra.mxu0 0.0
    %87 = vmatprep.subr.mxu0 0.0
    %88 = vmatpush2.msra.mxu0 0.0
    %89 = vmatprep.subr.mxu0 0.0
    %90 = vmatpush2.msra.mxu0 0.0
    %91 = vmatprep.subr.mxu0 0.0
    %92 = vmatpush2.msra.mxu0 0.0
    %93 = vmatprep.subr.mxu0 0.0
    %94 = vmatpush2.msra.mxu0 0.0
    %95 = vmatprep.subr.mxu0 0.0
    %96 = vmatpush2.msra.mxu0 0.0
    %97 = vmatprep.subr.mxu0 0.0
    %98 = vmatpush2.msra.mxu0 0.0
    %99 = vmatprep.subr.mxu0 0.0
    %100 = vmatpush2.msra.mxu0 0.0
    %101 = vmatprep.subr.mxu0 0.0
    %102 = vmatpush2.msra.mxu0 0.0
    %103 = vmatprep.subr.mxu0 0.0
    %104 = vmatpush2.msra.mxu0 0.0
    %105 = vmatprep.subr.mxu0 0.0
    %106 = vmatpush2.msra.mxu0 0.0
    %107 = vmatprep.mubr.f32.mxu0 0.0
    %108 = vmatmul.mubr.f32.gmra.mxu0 %v38
    %v109 = vpop.f32.mrf.mxu0
    %v110 = vadd.f32 0.0, %v109
    %v111 = vpop.f32.mrf.mxu0
    %v112 = vadd.f32 0.0, %v111
    %113 = vmatprep.mubr.f32.mxu0 0.0
    %114 = vmatmul.mubr.f32.gmra.mxu0 %v41
    %v115 = vpop.f32.mrf.mxu0
    %v116 = vadd.f32 0.0, %v115
    %v117 = vpop.f32.mrf.mxu0
    %v118 = vadd.f32 0.0, %v117
    %119 = vdwg.mxu0
    %v120 = vld [vmem:[%s2] sm:$0xff]
    %v121 = vld [vmem:[%s2 + $0x8] sm:$0xff]
    %v122 = vld [vmem:[%s2 + $0x10] sm:$0xff]
    %v123 = vld [vmem:[%s2 + $0x18] sm:$0xff]
    %v124 = vld [vmem:[%s2 + $0x20] sm:$0xff]
    %v125 = vld [vmem:[%s2 + $0x28] sm:$0xff]
    %v126 = vld [vmem:[%s2 + $0x30] sm:$0xff]
    %v127 = vld [vmem:[%s2 + $0x38] sm:$0xff]
    %v128 = vld [vmem:[%s2 + $0x40] sm:$0xff]
    %v129 = vld [vmem:[%s2 + $0x48] sm:$0xff]
    %v130 = vld [vmem:[%s2 + $0x50] sm:$0xff]
    %v131 = vld [vmem:[%s2 + $0x58] sm:$0xff]
    %v132 = vld [vmem:[%s2 + $0x60] sm:$0xff]
    %v133 = vld [vmem:[%s2 + $0x68] sm:$0xff]
    %v134 = vld [vmem:[%s2 + $0x70] sm:$0xff]
    %v135 = vld [vmem:[%s2 + $0x78] sm:$0xff]
    %136 = vmatprep.subr.mxu0 0.0
    %137 = vmatpush1.msra.mxu0 0.0
    %138 = vmatprep.subr.mxu0 0.0
    %139 = vmatpush1.msra.mxu0 0.0
    %140 = vmatprep.subr.mxu0 0.0
    %141 = vmatpush1.msra.mxu0 0.0
    %142 = vmatprep.subr.mxu0 0.0
    %143 = vmatpush1.msra.mxu0 0.0
    %144 = vmatprep.subr.mxu0 0.0
    %145 = vmatpush1.msra.mxu0 0.0
    %146 = vmatprep.subr.mxu0 0.0
    %147 = vmatpush1.msra.mxu0 0.0
    %148 = vmatprep.subr.mxu0 0.0
    %149 = vmatpush1.msra.mxu0 0.0
    %150 = vmatprep.subr.mxu0 0.0
    %151 = vmatpush1.msra.mxu0 0.0
    %152 = vmatprep.subr.mxu0 %v135
    %153 = vmatpush1.msra.mxu0 %v134
    %154 = vmatprep.subr.mxu0 %v133
    %155 = vmatpush1.msra.mxu0 %v132
    %156 = vmatprep.subr.mxu0 %v131
    %157 = vmatpush1.msra.mxu0 %v130
    %158 = vmatprep.subr.mxu0 %v129
    %159 = vmatpush1.msra.mxu0 %v128
    %160 = vmatprep.subr.mxu0 %v127
    %161 = vmatpush1.msra.mxu0 %v126
    %162 = vmatprep.subr.mxu0 %v125
    %163 = vmatpush1.msra.mxu0 %v124
    %164 = vmatprep.subr.mxu0 %v123
    %165 = vmatpush1.msra.mxu0 %v122
    %166 = vmatprep.subr.mxu0 %v121
    %167 = vmatpush1.msra.mxu0 %v120
    %168 = vmatprep.subr.mxu0 0.0
    %169 = vmatpush2.msra.mxu0 0.0
    %170 = vmatprep.subr.mxu0 0.0
    %171 = vmatpush2.msra.mxu0 0.0
    %172 = vmatprep.subr.mxu0 0.0
    %173 = vmatpush2.msra.mxu0 0.0
    %174 = vmatprep.subr.mxu0 0.0
    %175 = vmatpush2.msra.mxu0 0.0
    %176 = vmatprep.subr.mxu0 0.0
    %177 = vmatpush2.msra.mxu0 0.0
    %178 = vmatprep.subr.mxu0 0.0
    %179 = vmatpush2.msra.mxu0 0.0
    %180 = vmatprep.subr.mxu0 0.0
    %181 = vmatpush2.msra.mxu0 0.0
    %182 = vmatprep.subr.mxu0 0.0
    %183 = vmatpush2.msra.mxu0 0.0
    %184 = vmatprep.subr.mxu0 0.0
    %185 = vmatpush2.msra.mxu0 0.0
    %186 = vmatprep.subr.mxu0 0.0
    %187 = vmatpush2.msra.mxu0 0.0
    %188 = vmatprep.subr.mxu0 0.0
    %189 = vmatpush2.msra.mxu0 0.0
    %190 = vmatprep.subr.mxu0 0.0
    %191 = vmatpush2.msra.mxu0 0.0
    %192 = vmatprep.subr.mxu0 0.0
    %193 = vmatpush2.msra.mxu0 0.0
    %194 = vmatprep.subr.mxu0 0.0
    %195 = vmatpush2.msra.mxu0 0.0
    %196 = vmatprep.subr.mxu0 0.0
    %197 = vmatpush2.msra.mxu0 0.0
    %198 = vmatprep.subr.mxu0 0.0
    %199 = vmatpush2.msra.mxu0 0.0
    %200 = vmatprep.mubr.f32.mxu0 0.0
    %201 = vmatmul.mubr.f32.gmra.mxu0 %v38
    %v202 = vpop.f32.mrf.mxu0
    %v203 = vadd.f32 0.0, %v202
    %v204 = vpop.f32.mrf.mxu0
    %v205 = vadd.f32 0.0, %v204
    %206 = vmatprep.mubr.f32.mxu0 0.0
    %207 = vmatmul.mubr.f32.gmra.mxu0 %v41
    %v208 = vpop.f32.mrf.mxu0
    %v209 = vadd.f32 0.0, %v208
    %v210 = vpop.f32.mrf.mxu0
    %v211 = vadd.f32 0.0, %v210
    %212 = vdwg.mxu0
    %v213 = vxor.u32 %v110, 2147483648
    %v214 = vxor.u32 %v112, 2147483648
    %v215 = vxor.u32 %v116, 2147483648
    %v216 = vxor.u32 %v118, 2147483648
    %v217 = vmul.f32 %v213, 1.442695
    %v218 = vpow.pop %v217
    %v219 = vmul.f32 %v214, 1.442695
    %v220 = vpow.pop %v219
    %v221 = vmul.f32 %v215, 1.442695
    %v222 = vpow.pop %v221
    %v223 = vmul.f32 %v216, 1.442695
    %v224 = vpow.pop %v223
    %v225 = vadd.f32 %v218, 1.0
    %v226 = vadd.f32 %v220, 1.0
    %v227 = vadd.f32 %v222, 1.0
    %v228 = vadd.f32 %v224, 1.0
    %v229 = vrcp.pop %v225
    %v230 = vmul.f32 1.0, %v229
    %v231 = vrcp.pop %v226
    %v232 = vmul.f32 1.0, %v231
    %v233 = vrcp.pop %v227
    %v234 = vmul.f32 1.0, %v233
    %v235 = vrcp.pop %v228
    %v236 = vmul.f32 1.0, %v235
    %v237 = vmul.f32 %v110, %v230
    %v238 = vmul.f32 %v112, %v232
    %v239 = vmul.f32 %v116, %v234
    %v240 = vmul.f32 %v118, %v236
    %v241 = vmul.f32 %v237, %v203
    %v242 = vmul.f32 %v238, %v205
    %v243 = vmul.f32 %v239, %v209
    %v244 = vmul.f32 %v240, %v211
    %v245 = vld [vmem:[%s3] sm:$0xff]
    %v246 = vld [vmem:[%s3 + $0x8] sm:$0xff]
    %v247 = vld [vmem:[%s3 + $0x10] sm:$0xff]
    %v248 = vld [vmem:[%s3 + $0x18] sm:$0xff]
    %v249 = vld [vmem:[%s3 + $0x20] sm:$0xff]
    %v250 = vld [vmem:[%s3 + $0x28] sm:$0xff]
    %v251 = vld [vmem:[%s3 + $0x30] sm:$0xff]
    %v252 = vld [vmem:[%s3 + $0x38] sm:$0xff]
    %v253 = vld [vmem:[%s3 + $0x40] sm:$0xff]
    %v254 = vld [vmem:[%s3 + $0x48] sm:$0xff]
    %v255 = vld [vmem:[%s3 + $0x50] sm:$0xff]
    %v256 = vld [vmem:[%s3 + $0x58] sm:$0xff]
    %v257 = vld [vmem:[%s3 + $0x60] sm:$0xff]
    %v258 = vld [vmem:[%s3 + $0x68] sm:$0xff]
    %v259 = vld [vmem:[%s3 + $0x70] sm:$0xff]
    %v260 = vld [vmem:[%s3 + $0x78] sm:$0xff]
    %v261 = vld [vmem:[%s3 + $0x80] sm:$0xff]
    %v262 = vld [vmem:[%s3 + $0x88] sm:$0xff]
    %v263 = vld [vmem:[%s3 + $0x90] sm:$0xff]
    %v264 = vld [vmem:[%s3 + $0x98] sm:$0xff]
    %v265 = vld [vmem:[%s3 + $0xa0] sm:$0xff]
    %v266 = vld [vmem:[%s3 + $0xa8] sm:$0xff]
    %v267 = vld [vmem:[%s3 + $0xb0] sm:$0xff]
    %v268 = vld [vmem:[%s3 + $0xb8] sm:$0xff]
    %v269 = vld [vmem:[%s3 + $0xc0] sm:$0xff]
    %v270 = vld [vmem:[%s3 + $0xc8] sm:$0xff]
    %v271 = vld [vmem:[%s3 + $0xd0] sm:$0xff]
    %v272 = vld [vmem:[%s3 + $0xd8] sm:$0xff]
    %v273 = vld [vmem:[%s3 + $0xe0] sm:$0xff]
    %v274 = vld [vmem:[%s3 + $0xe8] sm:$0xff]
    %v275 = vld [vmem:[%s3 + $0xf0] sm:$0xff]
    %v276 = vld [vmem:[%s3 + $0xf8] sm:$0xff]
    %277 = vmatprep.subr.mxu0 0.0
    %278 = vmatpush1.msra.mxu0 %v260
    %279 = vmatprep.subr.mxu0 0.0
    %280 = vmatpush1.msra.mxu0 %v259
    %281 = vmatprep.subr.mxu0 0.0
    %282 = vmatpush1.msra.mxu0 %v258
    %283 = vmatprep.subr.mxu0 0.0
    %284 = vmatpush1.msra.mxu0 %v257
    %285 = vmatprep.subr.mxu0 0.0
    %286 = vmatpush1.msra.mxu0 %v256
    %287 = vmatprep.subr.mxu0 0.0
    %288 = vmatpush1.msra.mxu0 %v255
    %289 = vmatprep.subr.mxu0 0.0
    %290 = vmatpush1.msra.mxu0 %v254
    %291 = vmatprep.subr.mxu0 0.0
    %292 = vmatpush1.msra.mxu0 %v253
    %293 = vmatprep.subr.mxu0 0.0
    %294 = vmatpush1.msra.mxu0 %v252
    %295 = vmatprep.subr.mxu0 0.0
    %296 = vmatpush1.msra.mxu0 %v251
    %297 = vmatprep.subr.mxu0 0.0
    %298 = vmatpush1.msra.mxu0 %v250
    %299 = vmatprep.subr.mxu0 0.0
    %300 = vmatpush1.msra.mxu0 %v249
    %301 = vmatprep.subr.mxu0 0.0
    %302 = vmatpush1.msra.mxu0 %v248
    %303 = vmatprep.subr.mxu0 0.0
    %304 = vmatpush1.msra.mxu0 %v247
    %305 = vmatprep.subr.mxu0 0.0
    %306 = vmatpush1.msra.mxu0 %v246
    %307 = vmatprep.subr.mxu0 0.0
    %308 = vmatpush1.msra.mxu0 %v245
    %309 = vmatprep.subr.mxu0 0.0
    %310 = vmatpush2.msra.mxu0 %v276
    %311 = vmatprep.subr.mxu0 0.0
    %312 = vmatpush2.msra.mxu0 %v275
    %313 = vmatprep.subr.mxu0 0.0
    %314 = vmatpush2.msra.mxu0 %v274
    %315 = vmatprep.subr.mxu0 0.0
    %316 = vmatpush2.msra.mxu0 %v273
    %317 = vmatprep.subr.mxu0 0.0
    %318 = vmatpush2.msra.mxu0 %v272
    %319 = vmatprep.subr.mxu0 0.0
    %320 = vmatpush2.msra.mxu0 %v271
    %321 = vmatprep.subr.mxu0 0.0
    %322 = vmatpush2.msra.mxu0 %v270
    %323 = vmatprep.subr.mxu0 0.0
    %324 = vmatpush2.msra.mxu0 %v269
    %325 = vmatprep.subr.mxu0 0.0
    %326 = vmatpush2.msra.mxu0 %v268
    %327 = vmatprep.subr.mxu0 0.0
    %328 = vmatpush2.msra.mxu0 %v267
    %329 = vmatprep.subr.mxu0 0.0
    %330 = vmatpush2.msra.mxu0 %v266
    %331 = vmatprep.subr.mxu0 0.0
    %332 = vmatpush2.msra.mxu0 %v265
    %333 = vmatprep.subr.mxu0 0.0
    %334 = vmatpush2.msra.mxu0 %v264
    %335 = vmatprep.subr.mxu0 0.0
    %336 = vmatpush2.msra.mxu0 %v263
    %337 = vmatprep.subr.mxu0 0.0
    %338 = vmatpush2.msra.mxu0 %v262
    %339 = vmatprep.subr.mxu0 0.0
    %340 = vmatpush2.msra.mxu0 %v261
    %341 = vmatprep.mubr.f32.mxu0 %v242
    %342 = vmatmul.mubr.f32.gmra.mxu0 %v241
    %v343 = vpop.f32.mrf.mxu0
    %v344 = vadd.f32 0.0, %v343
    %v345 = vpop.f32.mrf.mxu0
    %346 = vmatprep.mubr.f32.mxu0 %v244
    %347 = vmatmul.mubr.f32.gmra.mxu0 %v243
    %v348 = vpop.f32.mrf.mxu0
    %v349 = vadd.f32 0.0, %v348
    %v350 = vpop.f32.mrf.mxu0
    %351 = vdwg.mxu0
    %352 = vst.msk [vmem:[#allocation2] sm:$0xff] %vm36, %v344
    %353 = vst.msk [vmem:[#allocation2 + $0x8] sm:$0xff] %vm36, %v349
    // Predicated region
    $region18: #{swiglu.1} parent=1 // pred_check
      _
    $region19: #{swiglu.1} parent=1 // pred_check_branch
      %355 = sbr.rel (0) target = $region21
    $region20: #{swiglu.1} parent=1 // pred_region
      %s357 = ssub.s32 256, 256
      %358 = vsyncadd [#allocation3], %s357
      %s359 = sshll.u32 [#allocation2], 4
      %s360 = int_to_ptr.vmem [resolvable:$true] %s359
      %365 = dma.vmem_to_hbm [thread:$0]  %s360, 256, %s4, [#allocation3], 128, 128, 8
    $region21: #{swiglu.1} parent=1 // pred_fallthru
      _
    // Predicated region
    $region22: #{swiglu.1} parent=1 // pred_check
      _
    $region23: #{swiglu.1} parent=1 // pred_check_branch
      %367 = sbr.rel (0) target = $region25
    $region24: #{swiglu.1} parent=1 // pred_region
      %368 = dma.done [#allocation3], 256
    $region25: #{swiglu.1} parent=1 // pred_fallthru
      _
    %369 = vsyncpa [#allocation3], 1

</llo_original>
